<compile_context>
chip_gen: v7x
topology: tpu7x:2x2x1
jax: 0.10.0
libtpu: 0.0.40
codegen_flags: <defaults>
</compile_context>

<pallas_src>
import functools
import math

import jax
import jax.numpy as jnp
from jax.experimental import pallas as pl
from jax.experimental.pallas import tpu as pltpu


VMEM_LIMIT_BYTES = 48 * 1024 * 1024   # > v5e/v6e scoped default, < v7x physical


def _round_up(a, b):
    return ((a + b - 1) // b) * b


def _pick_tile_rows(R, D, H, itemsize, requested):
    """Largest multiple-of-8 row tile that keeps the pipeline inside VMEM."""
    # Resident params (conservatively assume they are double-buffered too).
    param_bytes = 2 * itemsize * (D * H + H * D + 2 * D + H + D)
    # Per streamed row: x tile + out tile (double-buffered each) plus the f32
    # in-kernel temporaries (xn/y, h, z).
    per_row = 2 * 2 * D * itemsize + 4 * (2 * D + H)
    avail = max(VMEM_LIMIT_BYTES - param_bytes, per_row * 8)
    tr = (avail // per_row) // 8 * 8
    tr = max(8, min(requested, tr))
    tr = min(tr, _round_up(R, 8))
    return int(tr)


def _mixer_kernel(x_ref, gamma_ref, beta_ref, w1_ref, b1_ref, w2_ref, b2_ref,
                  o_ref, *, eps):
    # x_ref: (TILE_R, D) row tile of the flattened input.
    x = x_ref[...].astype(jnp.float32)

    # --- LayerNorm over the last dim (biased variance, as in nn.LayerNorm) ---
    mean = jnp.mean(x, axis=-1, keepdims=True)
    xc = x - mean
    var = jnp.mean(xc * xc, axis=-1, keepdims=True)
    xn = xc * jax.lax.rsqrt(var + eps)
    y = xn * gamma_ref[...].astype(jnp.float32) + beta_ref[...].astype(jnp.float32)

    # --- Linear -> ReLU -> Linear (weights resident in VMEM, MXU matmuls) ---
    h = jnp.dot(y, w1_ref[...].astype(jnp.float32),
                preferred_element_type=jnp.float32)
    h = jnp.maximum(h + b1_ref[...].astype(jnp.float32), 0.0)
    z = jnp.dot(h, w2_ref[...].astype(jnp.float32),
                preferred_element_type=jnp.float32)
    z = z + b2_ref[...].astype(jnp.float32)

    # --- Residual ---
    o_ref[...] = (x + z).astype(o_ref.dtype)


def feature_mixer_pallas(x, gamma, beta, w1, b1, w2, b2, *, eps=1e-5,
                         tile_rows=1024):
    """Forward of FeatureMixerLayer.

    x:     (..., D)
    gamma, beta: (D,)       LayerNorm affine params
    w1: (D, H), b1: (H,)    first Linear (stored input-major, i.e. W^T of torch)
    w2: (H, D), b2: (D,)    second Linear
    eps: LayerNorm epsilon (baked at trace time).
    """
    orig_shape = x.shape
    D = orig_shape[-1]
    H = w1.shape[-1]
    assert w1.shape == (D, H) and w2.shape == (H, D)
    assert gamma.shape == (D,) and beta.shape == (D,)
    assert b1.shape == (H,) and b2.shape == (D,)

    R = math.prod(orig_shape[:-1]) if len(orig_shape) > 1 else 1
    x2 = x.reshape(R, D)

    tr = _pick_tile_rows(R, D, H, x.dtype.itemsize, tile_rows)
    r_pad = _round_up(R, tr)
    if r_pad != R:
        # Padded rows are zeros -> LayerNorm stays finite (rsqrt(0 + eps));
        # their outputs are sliced off below.
        x2 = jnp.pad(x2, ((0, r_pad - R), (0, 0)))

    g2 = gamma.reshape(1, D)
    bt2 = beta.reshape(1, D)
    b1_2 = b1.reshape(1, H)
    b2_2 = b2.reshape(1, D)

    grid = (r_pad // tr,)
    flops = 2 * r_pad * D * H * 2 + 10 * r_pad * D
    bytes_accessed = (2 * r_pad * D + 2 * D * H + 3 * D + H) * x.dtype.itemsize

    out2 = pl.pallas_call(
        functools.partial(_mixer_kernel, eps=float(eps)),
        out_shape=jax.ShapeDtypeStruct((r_pad, D), x.dtype),
        grid=grid,
        in_specs=[
            pl.BlockSpec((tr, D), lambda i: (i, 0)),   # x rows   (streamed)
            pl.BlockSpec((1, D), lambda i: (0, 0)),    # gamma    (resident)
            pl.BlockSpec((1, D), lambda i: (0, 0)),    # beta     (resident)
            pl.BlockSpec((D, H), lambda i: (0, 0)),    # w1       (resident)
            pl.BlockSpec((1, H), lambda i: (0, 0)),    # b1       (resident)
            pl.BlockSpec((H, D), lambda i: (0, 0)),    # w2       (resident)
            pl.BlockSpec((1, D), lambda i: (0, 0)),    # b2       (resident)
        ],
        out_specs=pl.BlockSpec((tr, D), lambda i: (i, 0)),
        compiler_params=pltpu.CompilerParams(
            dimension_semantics=("parallel",),
            vmem_limit_bytes=VMEM_LIMIT_BYTES,
        ),
        cost_estimate=pl.CostEstimate(
            flops=flops, transcendentals=0, bytes_accessed=bytes_accessed),
    )(x2, g2, bt2, w1, b1_2, w2, b2_2)

    if r_pad != R:
        out2 = out2[:R]
    return out2.reshape(orig_shape)


def feature_mixer_reference(x, gamma, beta, w1, b1, w2, b2, eps=1e-5):
    """Pure-JAX reference mirroring the PyTorch forward."""
    mean = jnp.mean(x, axis=-1, keepdims=True)
    var = jnp.mean((x - mean) ** 2, axis=-1, keepdims=True)
    xn = (x - mean) / jnp.sqrt(var + eps)
    y = xn * gamma + beta
    h = jnp.maximum(y @ w1 + b1, 0.0)
    z = h @ w2 + b2
    return x + z


if __name__ == "__main__":
    key = jax.random.PRNGKey(0)
    B, S, D = 2, 8, 32          # batch=2, seq=8, in_dim=32
    mlp_ratio = 1
    H = int(D * mlp_ratio)

    ks = jax.random.split(key, 7)
    x = jax.random.normal(ks[0], (B, S, D), dtype=jnp.float32)
    # Module init is gamma=1/beta=0 and zero biases; perturb them slightly so
    # the correctness check exercises every parameter path.
    gamma = 1.0 + 0.1 * jax.random.normal(ks[1], (D,), dtype=jnp.float32)
    beta = 0.1 * jax.random.normal(ks[2], (D,), dtype=jnp.float32)
    # Linear weights: trunc_normal(std=0.02) as in the module __init__,
    # stored input-major (i.e. transpose of torch's (out, in) layout).
    w1 = 0.02 * jax.random.truncated_normal(ks[3], -2.0, 2.0, (D, H)).astype(jnp.float32)
    w2 = 0.02 * jax.random.truncated_normal(ks[4], -2.0, 2.0, (H, D)).astype(jnp.float32)
    b1 = 0.01 * jax.random.normal(ks[5], (H,), dtype=jnp.float32)
    b2 = 0.01 * jax.random.normal(ks[6], (D,), dtype=jnp.float32)

    out = feature_mixer_pallas(x, gamma, beta, w1, b1, w2, b2)
    out = jax.block_until_ready(out)

    ref = feature_mixer_reference(x, gamma, beta, w1, b1, w2, b2)
    assert out.shape == x.shape, out.shape
    max_err = jnp.max(jnp.abs(out - ref))
    assert jnp.allclose(out, ref, rtol=1e-3, atol=1e-3), f"max abs err = {max_err}"
    print("KERNEL_OK")
</pallas_src>

<mosaic_0001>
module attributes {stable_mosaic.version = 11 : i64} {
  func.func @_mixer_kernel(%arg0: i32, %arg1: memref<16x32xf32, #tpu.memory_space<vmem>>, %arg2: memref<1x32xf32, #tpu.memory_space<vmem>>, %arg3: memref<1x32xf32, #tpu.memory_space<vmem>>, %arg4: memref<32x32xf32, #tpu.memory_space<vmem>>, %arg5: memref<1x32xf32, #tpu.memory_space<vmem>>, %arg6: memref<32x32xf32, #tpu.memory_space<vmem>>, %arg7: memref<1x32xf32, #tpu.memory_space<vmem>>, %arg8: memref<16x32xf32, #tpu.memory_space<vmem>>) attributes {dimension_semantics = [#tpu.dimension_semantics<parallel>], iteration_bounds = array<i64: 1>, scalar_prefetch = 0 : i64, scratch_operands = 0 : i64, tpu.core_type = #tpu.core_type<tc>, window_params = [{transform_indices = @transform_0, window_bounds = array<i64: 16, 32>}, {pipeline_mode = #tpu.pipeline_mode<synchronous>, transform_indices = @transform_1, window_bounds = array<i64: 1, 32>}, {pipeline_mode = #tpu.pipeline_mode<synchronous>, transform_indices = @transform_2, window_bounds = array<i64: 1, 32>}, {pipeline_mode = #tpu.pipeline_mode<synchronous>, transform_indices = @transform_3, window_bounds = array<i64: 32, 32>}, {pipeline_mode = #tpu.pipeline_mode<synchronous>, transform_indices = @transform_4, window_bounds = array<i64: 1, 32>}, {pipeline_mode = #tpu.pipeline_mode<synchronous>, transform_indices = @transform_5, window_bounds = array<i64: 32, 32>}, {pipeline_mode = #tpu.pipeline_mode<synchronous>, transform_indices = @transform_6, window_bounds = array<i64: 1, 32>}, {transform_indices = @transform_7, window_bounds = array<i64: 16, 32>}]} {
    %c0 = arith.constant 0 : index
    %c0_0 = arith.constant 0 : index
    %0 = vector.load %arg1[%c0, %c0_0] : memref<16x32xf32, #tpu.memory_space<vmem>>, vector<16x32xf32>
    %cst = arith.constant dense<0.000000e+00> : vector<16xf32>
    %1 = vector.multi_reduction <add>, %0, %cst [1] : vector<16x32xf32> to vector<16xf32>
    %2 = vector.shape_cast %1 : vector<16xf32> to vector<16x1xf32>
    %cst_1 = arith.constant 3.200000e+01 : f32
    %3 = vector.broadcast %cst_1 : f32 to vector<16x1xf32>
    %4 = arith.divf %2, %3 : vector<16x1xf32>
    %5 = vector.broadcast %4 : vector<16x1xf32> to vector<16x32xf32>
    %6 = arith.subf %0, %5 : vector<16x32xf32>
    %7 = arith.mulf %6, %6 : vector<16x32xf32>
    %cst_2 = arith.constant dense<0.000000e+00> : vector<16xf32>
    %8 = vector.multi_reduction <add>, %7, %cst_2 [1] : vector<16x32xf32> to vector<16xf32>
    %9 = vector.shape_cast %8 : vector<16xf32> to vector<16x1xf32>
    %cst_3 = arith.constant 3.200000e+01 : f32
    %10 = vector.broadcast %cst_3 : f32 to vector<16x1xf32>
    %11 = arith.divf %9, %10 : vector<16x1xf32>
    %cst_4 = arith.constant 9.99999974E-6 : f32
    %12 = vector.broadcast %cst_4 : f32 to vector<16x1xf32>
    %13 = arith.addf %11, %12 : vector<16x1xf32>
    %14 = math.rsqrt %13 : vector<16x1xf32>
    %15 = vector.broadcast %14 : vector<16x1xf32> to vector<16x32xf32>
    %16 = arith.mulf %6, %15 : vector<16x32xf32>
    %c0_5 = arith.constant 0 : index
    %c0_6 = arith.constant 0 : index
    %17 = vector.load %arg2[%c0_5, %c0_6] : memref<1x32xf32, #tpu.memory_space<vmem>>, vector<1x32xf32>
    %18 = vector.broadcast %17 : vector<1x32xf32> to vector<16x32xf32>
    %19 = arith.mulf %16, %18 : vector<16x32xf32>
    %c0_7 = arith.constant 0 : index
    %c0_8 = arith.constant 0 : index
    %20 = vector.load %arg3[%c0_7, %c0_8] : memref<1x32xf32, #tpu.memory_space<vmem>>, vector<1x32xf32>
    %21 = vector.broadcast %20 : vector<1x32xf32> to vector<16x32xf32>
    %22 = arith.addf %19, %21 : vector<16x32xf32>
    %c0_9 = arith.constant 0 : index
    %c0_10 = arith.constant 0 : index
    %23 = vector.load %arg4[%c0_9, %c0_10] : memref<32x32xf32, #tpu.memory_space<vmem>>, vector<32x32xf32>
    %cst_11 = arith.constant dense<0.000000e+00> : vector<16x32xf32>
    %24 = tpu.matmul %22, %23, %cst_11 {dimension_numbers = #tpu.dot_dimension_numbers<[1], [0], [0], [1], [0, 0, 1, 1], [], []>} : vector<16x32xf32>, vector<32x32xf32>, vector<16x32xf32> -> vector<16x32xf32>
    %c0_12 = arith.constant 0 : index
    %c0_13 = arith.constant 0 : index
    %25 = vector.load %arg5[%c0_12, %c0_13] : memref<1x32xf32, #tpu.memory_space<vmem>>, vector<1x32xf32>
    %26 = vector.broadcast %25 : vector<1x32xf32> to vector<16x32xf32>
    %27 = arith.addf %24, %26 : vector<16x32xf32>
    %cst_14 = arith.constant 0.000000e+00 : f32
    %28 = vector.broadcast %cst_14 : f32 to vector<16x32xf32>
    %29 = arith.maximumf %27, %28 : vector<16x32xf32>
    %c0_15 = arith.constant 0 : index
    %c0_16 = arith.constant 0 : index
    %30 = vector.load %arg6[%c0_15, %c0_16] : memref<32x32xf32, #tpu.memory_space<vmem>>, vector<32x32xf32>
    %cst_17 = arith.constant dense<0.000000e+00> : vector<16x32xf32>
    %31 = tpu.matmul %29, %30, %cst_17 {dimension_numbers = #tpu.dot_dimension_numbers<[1], [0], [0], [1], [0, 0, 1, 1], [], []>} : vector<16x32xf32>, vector<32x32xf32>, vector<16x32xf32> -> vector<16x32xf32>
    %c0_18 = arith.constant 0 : index
    %c0_19 = arith.constant 0 : index
    %32 = vector.load %arg7[%c0_18, %c0_19] : memref<1x32xf32, #tpu.memory_space<vmem>>, vector<1x32xf32>
    %33 = vector.broadcast %32 : vector<1x32xf32> to vector<16x32xf32>
    %34 = arith.addf %31, %33 : vector<16x32xf32>
    %35 = arith.addf %0, %34 : vector<16x32xf32>
    %c0_20 = arith.constant 0 : index
    %c0_21 = arith.constant 0 : index
    %36 = vector.load %arg8[%c0_20, %c0_21] : memref<16x32xf32, #tpu.memory_space<vmem>>, vector<16x32xf32>
    tpu.vector_store %arg8[%c0_20, %c0_21], %35 {strides = array<i32>} : memref<16x32xf32, #tpu.memory_space<vmem>>, vector<16x32xf32>,
    return
  }
  func.func @transform_0(%arg0: i32) -> (i32, i32) {
    %c0_i32 = arith.constant 0 : i32
    %c0_i32_0 = arith.constant 0 : i32
    return %arg0, %c0_i32 : i32, i32
  }
  func.func @transform_1(%arg0: i32) -> (i32, i32) {
    %c0_i32 = arith.constant 0 : i32
    %c0_i32_0 = arith.constant 0 : i32
    %c0_i32_1 = arith.constant 0 : i32
    return %c0_i32, %c0_i32_0 : i32, i32
  }
  func.func @transform_2(%arg0: i32) -> (i32, i32) {
    %c0_i32 = arith.constant 0 : i32
    %c0_i32_0 = arith.constant 0 : i32
    %c0_i32_1 = arith.constant 0 : i32
    return %c0_i32, %c0_i32_0 : i32, i32
  }
  func.func @transform_3(%arg0: i32) -> (i32, i32) {
    %c0_i32 = arith.constant 0 : i32
    %c0_i32_0 = arith.constant 0 : i32
    %c0_i32_1 = arith.constant 0 : i32
    return %c0_i32, %c0_i32_0 : i32, i32
  }
  func.func @transform_4(%arg0: i32) -> (i32, i32) {
    %c0_i32 = arith.constant 0 : i32
    %c0_i32_0 = arith.constant 0 : i32
    %c0_i32_1 = arith.constant 0 : i32
    return %c0_i32, %c0_i32_0 : i32, i32
  }
  func.func @transform_5(%arg0: i32) -> (i32, i32) {
    %c0_i32 = arith.constant 0 : i32
    %c0_i32_0 = arith.constant 0 : i32
    %c0_i32_1 = arith.constant 0 : i32
    return %c0_i32, %c0_i32_0 : i32, i32
  }
  func.func @transform_6(%arg0: i32) -> (i32, i32) {
    %c0_i32 = arith.constant 0 : i32
    %c0_i32_0 = arith.constant 0 : i32
    %c0_i32_1 = arith.constant 0 : i32
    return %c0_i32, %c0_i32_0 : i32, i32
  }
  func.func @transform_7(%arg0: i32) -> (i32, i32) {
    %c0_i32 = arith.constant 0 : i32
    %c0_i32_0 = arith.constant 0 : i32
    return %arg0, %c0_i32 : i32, i32
  }
}

</mosaic_0001>

<llo_original>
// kernel: tpu_custom_call.1
$region0: #{tpu_custom_call.1}
  #allocation0 [shape = 'u32[]', space=smem, size = 0x4, offset = 0x4, fixed_abs, tag = 'smem constant byte address 0x4 - core index']
  #allocation1 [shape = 'u32[144,128]{1,0:T(1,128)}', space=vmem, size = 0x12000, scoped, tag = 'internal scratch']
  %s0 = inlined_call_operand.hbm [shape: f32[16,32], index: 0, kind: input, shape index: {}]
  %s1 = inlined_call_operand.vmem [shape: f32[1,32], index: 1, kind: input, shape index: {}]
  %s2 = inlined_call_operand.vmem [shape: f32[1,32], index: 2, kind: input, shape index: {}]
  %s3 = inlined_call_operand.hbm [shape: f32[32,32], index: 3, kind: input, shape index: {}]
  %s4 = inlined_call_operand.vmem [shape: f32[1,32], index: 4, kind: input, shape index: {}]
  %s5 = inlined_call_operand.hbm [shape: f32[32,32], index: 5, kind: input, shape index: {}]
  %s6 = inlined_call_operand.vmem [shape: f32[1,32], index: 6, kind: input, shape index: {}]
  %s7 = inlined_call_operand.hbm [shape: f32[16,32], index: 7, kind: output, shape index: {}]
  %s8 = sld [smem:[#allocation0]]
  $region50: #{tpu_custom_call.1} parent=0
    _
  %s10 = ssub.s32 1, %s8
  %s11 = scalar_select 0, %s10, %s8
  $region1: #{tpu_custom_call.1} parent=0
    #allocation2 [shape = 'u8[8192]{0}', space=vmem, size = 0x2000, scoped, tag = 'input window, operand 0, single buffered']
    #allocation3 [shape = 's32[1]{0}', space=sflag, size = 0x4, scoped, tag = 'scoped memory for tpu_custom_call.1']
    #allocation4 [shape = 's32[1]{0}', space=sflag, size = 0x4, scoped, tag = 'scoped memory for tpu_custom_call.1']
    #allocation5 [shape = 'u8[16384]{0}', space=vmem, size = 0x4000, scoped, tag = 'input window, operand 3, single buffered']
    #allocation6 [shape = 's32[1]{0}', space=sflag, size = 0x4, scoped, tag = 'scoped memory for tpu_custom_call.1']
    #allocation7 [shape = 'u8[16384]{0}', space=vmem, size = 0x4000, scoped, tag = 'input window, operand 5, single buffered']
    #allocation8 [shape = 'u8[8192]{0}', space=vmem, size = 0x2000, scoped, tag = 'output window, operand 0, single buffered']
    %12 = vsyncpa [#allocation3], 0
    %13 = vsyncpa [#allocation6], 0
    %14 = vsyncpa [#allocation4], 0
    // Predicated region
    $region2: #{tpu_custom_call.1} parent=1 // pred_check
      _
    $region3: #{tpu_custom_call.1} parent=1 // pred_check_branch
      %16 = sbr.rel (0) target = $region5
    $region4: #{tpu_custom_call.1} parent=1 // pred_region
      %s18 = ssub.s32 256, 256
      %19 = vsyncadd [#allocation3], %s18
      %s20 = sshll.u32 [#allocation2], 4
      %s21 = int_to_ptr.vmem [resolvable:$true] %s20
      %26 = dma.hbm_to_vmem [thread:$0]  %s0, 256, %s21, [#allocation3], 128, 128, 8
    $region5: #{tpu_custom_call.1} parent=1 // pred_fallthru
      _
    // Predicated region
    $region6: #{tpu_custom_call.1} parent=1 // pred_check
      _
    $region7: #{tpu_custom_call.1} parent=1 // pred_check_branch
      %28 = sbr.rel (0) target = $region9
    $region8: #{tpu_custom_call.1} parent=1 // pred_region
      _
    $region9: #{tpu_custom_call.1} parent=1 // pred_fallthru
      _
    // Predicated region
    $region10: #{tpu_custom_call.1} parent=1 // pred_check
      _
    $region11: #{tpu_custom_call.1} parent=1 // pred_check_branch
      %30 = sbr.rel (0) target = $region13
    $region12: #{tpu_custom_call.1} parent=1 // pred_region
      _
    $region13: #{tpu_custom_call.1} parent=1 // pred_fallthru
      _
    // Predicated region
    $region14: #{tpu_custom_call.1} parent=1 // pred_check
      _
    $region15: #{tpu_custom_call.1} parent=1 // pred_check_branch
      %32 = sbr.rel (0) target = $region17
    $region16: #{tpu_custom_call.1} parent=1 // pred_region
      %s34 = ssub.s32 512, 512
      %35 = vsyncadd [#allocation6], %s34
      %s36 = sshll.u32 [#allocation5], 4
      %s37 = int_to_ptr.vmem [resolvable:$true] %s36
      %42 = dma.hbm_to_vmem [thread:$0]  %s3, 512, %s37, [#allocation6], 128, 128, 8
    $region17: #{tpu_custom_call.1} parent=1 // pred_fallthru
      _
    // Predicated region
    $region18: #{tpu_custom_call.1} parent=1 // pred_check
      _
    $region19: #{tpu_custom_call.1} parent=1 // pred_check_branch
      %44 = sbr.rel (0) target = $region21
    $region20: #{tpu_custom_call.1} parent=1 // pred_region
      _
    $region21: #{tpu_custom_call.1} parent=1 // pred_fallthru
      _
    // Predicated region
    $region22: #{tpu_custom_call.1} parent=1 // pred_check
      _
    $region23: #{tpu_custom_call.1} parent=1 // pred_check_branch
      %46 = sbr.rel (0) target = $region25
    $region24: #{tpu_custom_call.1} parent=1 // pred_region
      %s48 = ssub.s32 512, 512
      %49 = vsyncadd [#allocation6], %s48
      %s50 = sshll.u32 [#allocation7], 4
      %s51 = int_to_ptr.vmem [resolvable:$true] %s50
      %56 = dma.hbm_to_vmem [thread:$0]  %s5, 512, %s51, [#allocation6], 128, 128, 8
    $region25: #{tpu_custom_call.1} parent=1 // pred_fallthru
      _
    // Predicated region
    $region26: #{tpu_custom_call.1} parent=1 // pred_check
      _
    $region27: #{tpu_custom_call.1} parent=1 // pred_check_branch
      %58 = sbr.rel (0) target = $region29
    $region28: #{tpu_custom_call.1} parent=1 // pred_region
      _
    $region29: #{tpu_custom_call.1} parent=1 // pred_fallthru
      _
    // Predicated region
    $region30: #{tpu_custom_call.1} parent=1 // pred_check
      _
    $region31: #{tpu_custom_call.1} parent=1 // pred_check_branch
      %60 = sbr.rel (0) target = $region33
    $region32: #{tpu_custom_call.1} parent=1 // pred_region
      %61 = dma.done [#allocation3], 256
    $region33: #{tpu_custom_call.1} parent=1 // pred_fallthru
      _
    // Predicated region
    $region34: #{tpu_custom_call.1} parent=1 // pred_check
      _
    $region35: #{tpu_custom_call.1} parent=1 // pred_check_branch
      %63 = sbr.rel (0) target = $region37
    $region36: #{tpu_custom_call.1} parent=1 // pred_region
      %64 = dma.done [#allocation6], 512
    $region37: #{tpu_custom_call.1} parent=1 // pred_fallthru
      _
    // Predicated region
    $region38: #{tpu_custom_call.1} parent=1 // pred_check
      _
    $region39: #{tpu_custom_call.1} parent=1 // pred_check_branch
      %66 = sbr.rel (0) target = $region41
    $region40: #{tpu_custom_call.1} parent=1 // pred_region
      %67 = dma.done [#allocation6], 512
    $region41: #{tpu_custom_call.1} parent=1 // pred_fallthru
      _
    %v68 = vld [vmem:[#allocation2] sm:$0xff]
    %v69 = vld [vmem:[#allocation2 + $0x8] sm:$0xff]
    %vm70 = vcmask 261120
    %v71 = vsel %vm70, %v68, 0.0
    %72 = vadd.xlane.f32.xlu0 %v71
    %v73 = vpop.xlane.xlu0 %72
    %v74 = vsel %vm70, %v69, 0.0
    %75 = vadd.xlane.f32.xlu0 %v74
    %v76 = vpop.xlane.xlu0 %75
    %v77 = vrcp.pop 32.0
    %v78 = vmul.f32 %v73, %v77
    %v79 = vmul.f32 %v76, %v77
    %v80 = vsub.f32 %v68, %v78
    %v81 = vsub.f32 %v69, %v79
    %v82 = vmul.f32 %v80, %v80
    %v83 = vmul.f32 %v81, %v81
    %v84 = vsel %vm70, %v82, 0.0
    %85 = vadd.xlane.f32.xlu0 %v84
    %v86 = vpop.xlane.xlu0 %85
    %v87 = vsel %vm70, %v83, 0.0
    %88 = vadd.xlane.f32.xlu0 %v87
    %v89 = vpop.xlane.xlu0 %88
    %v90 = vmul.f32 %v86, %v77
    %v91 = vmul.f32 %v89, %v77
    %v92 = vadd.f32 %v90, 1e-05
    %v93 = vadd.f32 %v91, 1e-05
    %v94 = vrsqrt.pop %v92
    %v95 = vrsqrt.pop %v93
    %v96 = vmul.f32 %v80, %v94
    %v97 = vmul.f32 %v81, %v95
    %v98 = vld [vmem:[%s1] sm:$0x1]
    %v100 = vlaneseq
    %v101 = vshrl.u32 %v100, 7
    %v102 = vsub.s32 0, %v101
    %v103 = vrot.slane %v98, %v102
    %v105 = vmul.f32 %v96, %v103
    %v106 = vmul.f32 %v97, %v103
    %v107 = vld [vmem:[%s2] sm:$0x1]
    %v109 = vlaneseq
    %v110 = vshrl.u32 %v109, 7
    %v111 = vsub.s32 0, %v110
    %v112 = vrot.slane %v107, %v111
    %v114 = vadd.f32 %v105, %v112
    %v115 = vadd.f32 %v106, %v112
    %v116 = vld [vmem:[#allocation5] sm:$0xff]
    %v117 = vld [vmem:[#allocation5 + $0x8] sm:$0xff]
    %v118 = vld [vmem:[#allocation5 + $0x10] sm:$0xff]
    %v119 = vld [vmem:[#allocation5 + $0x18] sm:$0xff]
    %v120 = vld [vmem:[%s4] sm:$0x1]
    %v122 = vlaneseq
    %v123 = vshrl.u32 %v122, 7
    %v124 = vsub.s32 0, %v123
    %v125 = vrot.slane %v120, %v124
    %v128 = vsel %vm70, %v114, 0
    %v131 = vsel %vm70, %v115, 0
    %133 = vmatprep.subr.mxu0 0.0
    %134 = vmatpush1.msra.mxu0 %v116
    %135 = vmatprep.subr.mxu0 0.0
    %136 = vmatpush1.msra.mxu0 %v117
    %137 = vmatprep.subr.mxu0 0.0
    %138 = vmatpush1.msra.mxu0 %v118
    %139 = vmatprep.subr.mxu0 0.0
    %140 = vmatpush1.msra.mxu0 %v119
    %141 = vmatprep.subr.mxu0 0.0
    %142 = vmatpush1.msra.mxu0 0.0
    %143 = vmatprep.subr.mxu0 0.0
    %144 = vmatpush1.msra.mxu0 0.0
    %145 = vmatprep.subr.mxu0 0.0
    %146 = vmatpush1.msra.mxu0 0.0
    %147 = vmatprep.subr.mxu0 0.0
    %148 = vmatpush1.msra.mxu0 0.0
    %149 = vmatprep.subr.mxu0 0.0
    %150 = vmatpush1.msra.mxu0 0.0
    %151 = vmatprep.subr.mxu0 0.0
    %152 = vmatpush1.msra.mxu0 0.0
    %153 = vmatprep.subr.mxu0 0.0
    %154 = vmatpush1.msra.mxu0 0.0
    %155 = vmatprep.subr.mxu0 0.0
    %156 = vmatpush1.msra.mxu0 0.0
    %157 = vmatprep.subr.mxu0 0.0
    %158 = vmatpush1.msra.mxu0 0.0
    %159 = vmatprep.subr.mxu0 0.0
    %160 = vmatpush1.msra.mxu0 0.0
    %161 = vmatprep.subr.mxu0 0.0
    %162 = vmatpush1.msra.mxu0 0.0
    %163 = vmatprep.subr.mxu0 0.0
    %164 = vmatpush1.msra.mxu0 0.0
    %165 = vmatprep.subr.mxu0 0.0
    %166 = vmatpush1.msra.mxu0 0.0
    %167 = vmatprep.subr.mxu0 0.0
    %168 = vmatpush1.msra.mxu0 0.0
    %169 = vmatprep.subr.mxu0 0.0
    %170 = vmatpush1.msra.mxu0 0.0
    %171 = vmatprep.subr.mxu0 0.0
    %172 = vmatpush1.msra.mxu0 0.0
    %173 = vmatprep.subr.mxu0 0.0
    %174 = vmatpush1.msra.mxu0 0.0
    %175 = vmatprep.subr.mxu0 0.0
    %176 = vmatpush1.msra.mxu0 0.0
    %177 = vmatprep.subr.mxu0 0.0
    %178 = vmatpush1.msra.mxu0 0.0
    %179 = vmatprep.subr.mxu0 0.0
    %180 = vmatpush1.msra.mxu0 0.0
    %181 = vmatprep.subr.mxu0 0.0
    %182 = vmatpush1.msra.mxu0 0.0
    %183 = vmatprep.subr.mxu0 0.0
    %184 = vmatpush1.msra.mxu0 0.0
    %185 = vmatprep.subr.mxu0 0.0
    %186 = vmatpush1.msra.mxu0 0.0
    %187 = vmatprep.subr.mxu0 0.0
    %188 = vmatpush1.msra.mxu0 0.0
    %189 = vmatprep.subr.mxu0 0.0
    %190 = vmatpush1.msra.mxu0 0.0
    %191 = vmatprep.subr.mxu0 0.0
    %192 = vmatpush1.msra.mxu0 0.0
    %193 = vmatprep.subr.mxu0 0.0
    %194 = vmatpush1.msra.mxu0 0.0
    %195 = vmatprep.subr.mxu0 0.0
    %196 = vmatpush1.msra.mxu0 0.0
    %197 = vmatprep.mubr.f32.mxu0 0.0
    %198 = vmatmul.mubr.f32.gmra.mrb[0].mxu0 %v128
    %v199 = vpop.f32.mrb[0].mxu0
    %v200 = vadd.f32 %v125, %v199
    %v201 = vpop.f32.mrb[0].mxu0
    %202 = vmatprep.mubr.f32.mxu0 0.0
    %203 = vmatmul.mubr.f32.gmra.mrb[0].mxu0 %v131
    %v204 = vpop.f32.mrb[0].mxu0
    %v205 = vadd.f32 %v125, %v204
    %v206 = vpop.f32.mrb[0].mxu0
    %207 = vdwg.mxu0
    %v208 = vmax.f32 %v200, 0.0
    %v209 = vmax.f32 %v205, 0.0
    %v210 = vld [vmem:[#allocation7] sm:$0xff]
    %v211 = vld [vmem:[#allocation7 + $0x8] sm:$0xff]
    %v212 = vld [vmem:[#allocation7 + $0x10] sm:$0xff]
    %v213 = vld [vmem:[#allocation7 + $0x18] sm:$0xff]
    %v214 = vld [vmem:[%s6] sm:$0x1]
    %v216 = vlaneseq
    %v217 = vshrl.u32 %v216, 7
    %v218 = vsub.s32 0, %v217
    %v219 = vrot.slane %v214, %v218
    %v222 = vsel %vm70, %v208, 0
    %v225 = vsel %vm70, %v209, 0
    %227 = vmatprep.subr.mxu0 0.0
    %228 = vmatpush1.msra.mxu0 %v210
    %229 = vmatprep.subr.mxu0 0.0
    %230 = vmatpush1.msra.mxu0 %v211
    %231 = vmatprep.subr.mxu0 0.0
    %232 = vmatpush1.msra.mxu0 %v212
    %233 = vmatprep.subr.mxu0 0.0
    %234 = vmatpush1.msra.mxu0 %v213
    %235 = vmatprep.subr.mxu0 0.0
    %236 = vmatpush1.msra.mxu0 0.0
    %237 = vmatprep.subr.mxu0 0.0
    %238 = vmatpush1.msra.mxu0 0.0
    %239 = vmatprep.subr.mxu0 0.0
    %240 = vmatpush1.msra.mxu0 0.0
    %241 = vmatprep.subr.mxu0 0.0
    %242 = vmatpush1.msra.mxu0 0.0
    %243 = vmatprep.subr.mxu0 0.0
    %244 = vmatpush1.msra.mxu0 0.0
    %245 = vmatprep.subr.mxu0 0.0
    %246 = vmatpush1.msra.mxu0 0.0
    %247 = vmatprep.subr.mxu0 0.0
    %248 = vmatpush1.msra.mxu0 0.0
    %249 = vmatprep.subr.mxu0 0.0
    %250 = vmatpush1.msra.mxu0 0.0
    %251 = vmatprep.subr.mxu0 0.0
    %252 = vmatpush1.msra.mxu0 0.0
    %253 = vmatprep.subr.mxu0 0.0
    %254 = vmatpush1.msra.mxu0 0.0
    %255 = vmatprep.subr.mxu0 0.0
    %256 = vmatpush1.msra.mxu0 0.0
    %257 = vmatprep.subr.mxu0 0.0
    %258 = vmatpush1.msra.mxu0 0.0
    %259 = vmatprep.subr.mxu0 0.0
    %260 = vmatpush1.msra.mxu0 0.0
    %261 = vmatprep.subr.mxu0 0.0
    %262 = vmatpush1.msra.mxu0 0.0
    %263 = vmatprep.subr.mxu0 0.0
    %264 = vmatpush1.msra.mxu0 0.0
    %265 = vmatprep.subr.mxu0 0.0
    %266 = vmatpush1.msra.mxu0 0.0
    %267 = vmatprep.subr.mxu0 0.0
    %268 = vmatpush1.msra.mxu0 0.0
    %269 = vmatprep.subr.mxu0 0.0
    %270 = vmatpush1.msra.mxu0 0.0
    %271 = vmatprep.subr.mxu0 0.0
    %272 = vmatpush1.msra.mxu0 0.0
    %273 = vmatprep.subr.mxu0 0.0
    %274 = vmatpush1.msra.mxu0 0.0
    %275 = vmatprep.subr.mxu0 0.0
    %276 = vmatpush1.msra.mxu0 0.0
    %277 = vmatprep.subr.mxu0 0.0
    %278 = vmatpush1.msra.mxu0 0.0
    %279 = vmatprep.subr.mxu0 0.0
    %280 = vmatpush1.msra.mxu0 0.0
    %281 = vmatprep.subr.mxu0 0.0
    %282 = vmatpush1.msra.mxu0 0.0
    %283 = vmatprep.subr.mxu0 0.0
    %284 = vmatpush1.msra.mxu0 0.0
    %285 = vmatprep.subr.mxu0 0.0
    %286 = vmatpush1.msra.mxu0 0.0
    %287 = vmatprep.subr.mxu0 0.0
    %288 = vmatpush1.msra.mxu0 0.0
    %289 = vmatprep.subr.mxu0 0.0
    %290 = vmatpush1.msra.mxu0 0.0
    %291 = vmatprep.mubr.f32.mxu0 0.0
    %292 = vmatmul.mubr.f32.gmra.mrb[0].mxu0 %v222
    %v293 = vpop.f32.mrb[0].mxu0
    %v294 = vadd.f32 %v219, %v293
    %v295 = vpop.f32.mrb[0].mxu0
    %296 = vmatprep.mubr.f32.mxu0 0.0
    %297 = vmatmul.mubr.f32.gmra.mrb[0].mxu0 %v225
    %v298 = vpop.f32.mrb[0].mxu0
    %v299 = vadd.f32 %v219, %v298
    %v300 = vpop.f32.mrb[0].mxu0
    %301 = vdwg.mxu0
    %v302 = vadd.f32 %v68, %v294
    %v303 = vadd.f32 %v69, %v299
    %304 = vst.msk [vmem:[#allocation8] sm:$0xff] %vm70, %v302
    %305 = vst.msk [vmem:[#allocation8 + $0x8] sm:$0xff] %vm70, %v303
    // Predicated region
    $region42: #{tpu_custom_call.1} parent=1 // pred_check
      _
    $region43: #{tpu_custom_call.1} parent=1 // pred_check_branch
      %307 = sbr.rel (0) target = $region45
    $region44: #{tpu_custom_call.1} parent=1 // pred_region
      %s309 = ssub.s32 256, 256
      %310 = vsyncadd [#allocation4], %s309
      %s311 = sshll.u32 [#allocation8], 4
      %s312 = int_to_ptr.vmem [resolvable:$true] %s311
      %317 = dma.vmem_to_hbm [thread:$0]  %s312, 256, %s7, [#allocation4], 128, 128, 8
    $region45: #{tpu_custom_call.1} parent=1 // pred_fallthru
      _
    // Predicated region
    $region46: #{tpu_custom_call.1} parent=1 // pred_check
      _
    $region47: #{tpu_custom_call.1} parent=1 // pred_check_branch
      %319 = sbr.rel (0) target = $region49
    $region48: #{tpu_custom_call.1} parent=1 // pred_region
      %320 = dma.done [#allocation4], 256
    $region49: #{tpu_custom_call.1} parent=1 // pred_fallthru
      _
    %321 = vsyncpa [#allocation3], 1
    %322 = vsyncpa [#allocation6], 1
    %323 = vsyncpa [#allocation4], 1

</llo_original>
